<compile_context>
chip_gen: v5e
topology: v5e:2x2
jax: 0.10.0
libtpu: 0.0.40
codegen_flags: <defaults>
</compile_context>

<pallas_src>
import jax
import jax.numpy as jnp
from jax.experimental import pallas as pl
from jax.experimental.pallas import tpu as pltpu

_LOG2E = 1.4426950408889634


def _round_up(x, m):
    return ((x + m - 1) // m) * m


def _cdiv(a, b):
    return (a + b - 1) // b


def _tpu_vmem_capacity_bytes():
    """Physical VMEM per TensorCore; conservative 64 MiB fallback if unavailable."""
    try:
        return int(pltpu.get_tpu_info().vmem_capacity_bytes)
    except Exception:
        return 64 * 1024 * 1024


def _vmem_estimate_bytes(tn, tq, dp):
    """Rough per-call VMEM footprint (double-buffered inputs/outputs + temps)."""
    f_buf = tn * 128 * 4          # [TN, 8] f32, lane dim padded 8 -> 128 in VMEM
    w_buf = 8 * tq * 4            # [8, TQ] f32
    oh_buf = dp * tn * 2          # [Dp, TN] bf16 one-hot
    out_buf = dp * tq * 4         # [Dp, TQ] f32 accumulator block
    temps = tn * tq * 4 + tn * tq * 2 + dp * tq * 4   # sum_z2 f32, phi bf16, dot out
    return 2 * (f_buf + w_buf + oh_buf + out_buf) + temps


def _perslay_kernel(f_ref, w_ref, oh_ref, out_ref):
    # f_ref:   [TN, 8]  f32  per-point features [x0^2, x1^2, x0, x1, 1, 0, 0, 0]
    # w_ref:   [8, TQ]  f32  quadratic-expansion weights with -log2(e) folded in
    # oh_ref:  [Dp, TN] bf16 one-hot scatter matrix (precomputed in the wrapper)
    # out_ref: [Dp, TQ] f32  accumulator block, resident across the n axis
    @pl.when(pl.program_id(1) == 0)
    def _():
        out_ref[...] = jnp.zeros_like(out_ref)

    # log2(phi) = -log2(e) * sum_c ((x_c - p_c) * s_c)^2, as one MXU matmul.
    log2_phi = jnp.dot(f_ref[...], w_ref[...],
                       preferred_element_type=jnp.float32)       # [TN, TQ]
    phi = jnp.exp2(log2_phi).astype(jnp.bfloat16)                # EUP, then cheap cast

    # scatter_sum over point_index as a bf16 x bf16 -> f32 MXU matmul.
    out_ref[...] += jnp.dot(oh_ref[...], phi,
                            preferred_element_type=jnp.float32)


def perslay_reference(points, point_index, sample_points, sample_inverse_sigmas,
                      num_diagrams):
    """Pure-JAX reference matching the PyTorch forward semantics."""
    x = points[..., None]                                  # [N, 2, 1]
    z = (x - sample_points) * sample_inverse_sigmas        # [N, 2, Q]
    phi = jnp.exp(-jnp.sum(z ** 2, axis=-2))               # [N, Q]
    out = jnp.zeros((num_diagrams, phi.shape[1]), jnp.float32)
    return out.at[point_index].add(phi)                    # scatter_sum, dim=0


def perslay_forward(points, point_index, sample_points, sample_inverse_sigmas,
                    num_diagrams, *, block_n=1024, block_q=None, use_kernel=None):
    """PersLay forward (gaussian transform + uniform weights + scatter_sum) -> [D, Q]."""
    points = points.astype(jnp.float32)
    sample_points = sample_points.astype(jnp.float32)
    sample_inverse_sigmas = sample_inverse_sigmas.astype(jnp.float32)

    N = points.shape[0]
    Q = sample_points.shape[1]
    D = int(num_diagrams)

    # ---- small-problem fast path: pallas_call overhead dwarfs the work --------
    if use_kernel is None:
        use_kernel = (N * Q >= (1 << 16))
    if not use_kernel:
        return perslay_reference(points, point_index, sample_points,
                                 sample_inverse_sigmas, D)

    # ---- generation-aware budgets ---------------------------------------------
    vmem_cap = _tpu_vmem_capacity_bytes()
    vmem_budget = (vmem_cap * 3) // 4                   # leave headroom for internal scratch
    likely_two_tc = vmem_cap <= 64 * 1024 * 1024        # v7x-class: 2 TCs / 64 MiB per TC
    if block_q is None:
        block_q = 512 if likely_two_tc else 1024        # single-TC parts: fewer, larger q tiles

    # ---- Q tiling: lane-dense, outer "parallel" axis ---------------------------
    Qp = _round_up(max(Q, 1), 128)
    n_q = _cdiv(Qp, block_q)
    if likely_two_tc and Qp >= 256:
        n_q = max(n_q, 2)                               # keep both TensorCores busy
    TQ = _round_up(_cdiv(Qp, n_q), 128)
    Qp = n_q * TQ

    # ---- D padding: sublane-aligned resident accumulator -----------------------
    Dp = _round_up(max(D, 1), 8)

    # ---- N tiling (with a VMEM-budget shrink for large D) ----------------------
    single_tn = _round_up(max(N, 1), 8)
    if N <= block_n and _vmem_estimate_bytes(single_tn, TQ, Dp) <= vmem_budget:
        TN = single_tn                                  # single tile: full-dim block
    else:
        TN = max(128, _round_up(block_n, 128))
        while TN > 128 and _vmem_estimate_bytes(TN, TQ, Dp) > vmem_budget:
            TN = max(128, _round_up(TN // 2, 128))
    Np = _round_up(N, TN)

    # ---- W [8, Qp]: quadratic expansion with the -log2(e) factor folded in -----
    s2 = sample_inverse_sigmas ** 2                     # [2, Q]
    p = sample_points                                   # [2, Q]
    c = jnp.float32(-_LOG2E)
    w = jnp.zeros((8, Qp), jnp.float32)
    w = w.at[0, :Q].set(c * s2[0])                                   # * x0^2
    w = w.at[1, :Q].set(c * s2[1])                                   # * x1^2
    w = w.at[2, :Q].set(c * (-2.0) * p[0] * s2[0])                   # * x0
    w = w.at[3, :Q].set(c * (-2.0) * p[1] * s2[1])                   # * x1
    w = w.at[4, :Q].set(c * (p[0] ** 2 * s2[0] + p[1] ** 2 * s2[1])) # * 1

    # ---- per-point features [Np, 8]; padded rows all-zero ----------------------
    # (Layout note: the 8-wide lane dim pads to 128 in VMEM; accepted — the f@W
    #  matmul is a tiny fraction of MXU cycles and ~1 MiB of VMEM per buffer.)
    f = jnp.zeros((Np, 8), jnp.float32)
    f = f.at[:N, 0].set(points[:, 0] ** 2)
    f = f.at[:N, 1].set(points[:, 1] ** 2)
    f = f.at[:N, 2].set(points[:, 0])
    f = f.at[:N, 3].set(points[:, 1])
    f = f.at[:N, 4].set(1.0)

    # ---- one-hot scatter matrix [Dp, Np] (bf16, exact), built once -------------
    # Padded tail points get id = Dp (out of range) -> all-zero column -> no
    # contribution.  Out-of-range real ids either land in padding rows (sliced
    # off) or contribute nothing, matching jnp .at[].add drop semantics on [0:D).
    ids = jnp.full((Np,), Dp, dtype=jnp.int32).at[:N].set(point_index.astype(jnp.int32))
    onehot = (jnp.arange(Dp, dtype=jnp.int32)[:, None] == ids[None, :]).astype(jnp.bfloat16)

    n_n = Np // TN
    grid = (n_q, n_n)   # N (reduction) innermost so the accumulator block stays resident

    est = _vmem_estimate_bytes(TN, TQ, Dp)
    vmem_limit = int(min(vmem_budget, max(est + est // 2, 32 * 1024 * 1024)))

    cost = pl.CostEstimate(
        flops=2 * Np * 8 * Qp + 2 * Dp * Np * Qp,
        transcendentals=Np * Qp,
        bytes_accessed=n_q * (Np * 8 * 4 + Dp * Np * 2) + 8 * Qp * 4 + Dp * Qp * 4,
    )

    out = pl.pallas_call(
        _perslay_kernel,
        out_shape=jax.ShapeDtypeStruct((Dp, Qp), jnp.float32),
        grid_spec=pltpu.PrefetchScalarGridSpec(
            num_scalar_prefetch=0,
            grid=grid,
            in_specs=[
                pl.BlockSpec((TN, 8), lambda q, n: (n, 0)),    # features f
                pl.BlockSpec((8, TQ), lambda q, n: (0, q)),    # W (folded constants)
                pl.BlockSpec((Dp, TN), lambda q, n: (0, n)),   # one-hot (bf16)
            ],
            out_specs=pl.BlockSpec((Dp, TQ), lambda q, n: (0, q)),
        ),
        compiler_params=pltpu.CompilerParams(
            dimension_semantics=("parallel", "arbitrary"),
            vmem_limit_bytes=vmem_limit,
        ),
        cost_estimate=cost,
    )(f, w, onehot)

    return out[:D, :Q]


if __name__ == "__main__":
    key = jax.random.PRNGKey(0)
    k_pts, k_sp, k_sig = jax.random.split(key, 3)

    # Small problem: N=8 points across D=3 persistence diagrams, Q=32 features.
    N, Q, D = 8, 32, 3
    points = jax.random.uniform(k_pts, (N, 2), dtype=jnp.float32)         # coords in (0, 1)
    point_index = jnp.array([0, 0, 0, 1, 1, 1, 2, 2], dtype=jnp.int32)    # [N]

    # Parameter init matching GaussianPointTransformer.reset_parameters().
    sample_points = jax.random.uniform(k_sp, (2, Q), dtype=jnp.float32,
                                       minval=0.0, maxval=1.0)
    sample_inverse_sigmas = jax.random.uniform(k_sig, (2, Q), dtype=jnp.float32,
                                               minval=0.8, maxval=1.2)

    # Force the Pallas path (the auto fast-path would use XLA for this tiny shape).
    out = perslay_forward(points, point_index, sample_points,
                          sample_inverse_sigmas, D, use_kernel=True)
    out = jax.block_until_ready(out)

    ref = perslay_reference(points, point_index, sample_points,
                            sample_inverse_sigmas, D)
    assert out.shape == (D, Q), f"bad shape {out.shape}"
    # bf16 phi in the scatter matmul loses ~3 significant digits -> relaxed tolerance.
    assert jnp.allclose(out, ref, atol=2e-2, rtol=2e-2), "mismatch vs reference"

    # Fast-path sanity check (pure-JAX dispatch, exact vs reference).
    out_small = perslay_forward(points, point_index, sample_points,
                                sample_inverse_sigmas, D)
    assert jnp.allclose(out_small, ref, atol=1e-5, rtol=1e-5)

    print("KERNEL_OK")
</pallas_src>

<mosaic_0001>
module attributes {stable_mosaic.version = 11 : i64} {
  func.func @_perslay_kernel(%arg0: i32, %arg1: i32, %arg2: memref<8x8xf32, #tpu.memory_space<vmem>>, %arg3: memref<8x128xf32, #tpu.memory_space<vmem>>, %arg4: memref<8x8xbf16, #tpu.memory_space<vmem>>, %arg5: memref<8x128xf32, #tpu.memory_space<vmem>>) attributes {dimension_semantics = [#tpu.dimension_semantics<parallel>, #tpu.dimension_semantics<arbitrary>], iteration_bounds = array<i64: 1, 1>, scalar_prefetch = 0 : i64, scratch_operands = 0 : i64, tpu.core_type = #tpu.core_type<tc>, window_params = [{transform_indices = @transform_0, window_bounds = array<i64: 8, 8>}, {transform_indices = @transform_1, window_bounds = array<i64: 8, 128>}, {transform_indices = @transform_2, window_bounds = array<i64: 8, 8>}, {transform_indices = @transform_3, window_bounds = array<i64: 8, 128>}]} {
    %c0_i32 = arith.constant 0 : i32
    %0 = arith.cmpi eq, %arg1, %c0_i32 : i32
    %1 = arith.extui %0 : i1 to i32
    %c0_i32_0 = arith.constant 0 : i32
    %2 = arith.cmpi ne, %1, %c0_i32_0 : i32
    scf.if %2 {
      %cst_11 = arith.constant 0.000000e+00 : f32
      %13 = vector.broadcast %cst_11 : f32 to vector<8x128xf32>
      %c0_12 = arith.constant 0 : index
      %c0_13 = arith.constant 0 : index
      %14 = vector.load %arg5[%c0_12, %c0_13] : memref<8x128xf32, #tpu.memory_space<vmem>>, vector<8x128xf32>
      tpu.vector_store %arg5[%c0_12, %c0_13], %13 {strides = array<i32>} : memref<8x128xf32, #tpu.memory_space<vmem>>, vector<8x128xf32>,
    } else {
    }
    %c0 = arith.constant 0 : index
    %c0_1 = arith.constant 0 : index
    %3 = vector.load %arg2[%c0, %c0_1] : memref<8x8xf32, #tpu.memory_space<vmem>>, vector<8x8xf32>
    %c0_2 = arith.constant 0 : index
    %c0_3 = arith.constant 0 : index
    %4 = vector.load %arg3[%c0_2, %c0_3] : memref<8x128xf32, #tpu.memory_space<vmem>>, vector<8x128xf32>
    %cst = arith.constant dense<0.000000e+00> : vector<8x128xf32>
    %5 = tpu.matmul %3, %4, %cst {dimension_numbers = #tpu.dot_dimension_numbers<[1], [0], [0], [1], [0, 0, 1, 1], [], []>} : vector<8x8xf32>, vector<8x128xf32>, vector<8x128xf32> -> vector<8x128xf32>
    %6 = math.exp2 %5 : vector<8x128xf32>
    %7 = arith.truncf %6 : vector<8x128xf32> to vector<8x128xbf16>
    %c0_4 = arith.constant 0 : index
    %c0_5 = arith.constant 0 : index
    %8 = vector.load %arg5[%c0_4, %c0_5] : memref<8x128xf32, #tpu.memory_space<vmem>>, vector<8x128xf32>
    %c0_6 = arith.constant 0 : index
    %c0_7 = arith.constant 0 : index
    %9 = vector.load %arg4[%c0_6, %c0_7] : memref<8x8xbf16, #tpu.memory_space<vmem>>, vector<8x8xbf16>
    %cst_8 = arith.constant dense<0.000000e+00> : vector<8x128xf32>
    %10 = tpu.matmul %9, %7, %cst_8 {dimension_numbers = #tpu.dot_dimension_numbers<[1], [0], [0], [1], [0, 0, 1, 1], [], []>} : vector<8x8xbf16>, vector<8x128xbf16>, vector<8x128xf32> -> vector<8x128xf32>
    %11 = arith.addf %8, %10 : vector<8x128xf32>
    %c0_9 = arith.constant 0 : index
    %c0_10 = arith.constant 0 : index
    %12 = vector.load %arg5[%c0_9, %c0_10] : memref<8x128xf32, #tpu.memory_space<vmem>>, vector<8x128xf32>
    tpu.vector_store %arg5[%c0_9, %c0_10], %11 {strides = array<i32>} : memref<8x128xf32, #tpu.memory_space<vmem>>, vector<8x128xf32>,
    return
  }
  func.func @transform_0(%arg0: i32, %arg1: i32) -> (i32, i32) {
    %c0_i32 = arith.constant 0 : i32
    %c0_i32_0 = arith.constant 0 : i32
    return %arg1, %c0_i32 : i32, i32
  }
  func.func @transform_1(%arg0: i32, %arg1: i32) -> (i32, i32) {
    %c0_i32 = arith.constant 0 : i32
    %c0_i32_0 = arith.constant 0 : i32
    return %c0_i32, %arg0 : i32, i32
  }
  func.func @transform_2(%arg0: i32, %arg1: i32) -> (i32, i32) {
    %c0_i32 = arith.constant 0 : i32
    %c0_i32_0 = arith.constant 0 : i32
    return %c0_i32, %arg1 : i32, i32
  }
  func.func @transform_3(%arg0: i32, %arg1: i32) -> (i32, i32) {
    %c0_i32 = arith.constant 0 : i32
    %c0_i32_0 = arith.constant 0 : i32
    return %c0_i32, %arg0 : i32, i32
  }
}

</mosaic_0001>

<llo_original>
// kernel: tpu_custom_call.1
$region0: #{tpu_custom_call.1}
  #allocation0 [shape = 'u32[]', space=smem, size = 0x4, offset = 0x4, fixed_abs, tag = 'smem constant byte address 0x4 - core index']
  #allocation1 [shape = 'u32[72,128]{1,0:T(1,128)}', space=vmem, size = 0x9000, scoped, tag = 'internal scratch']
  %s0 = inlined_call_operand.hbm [shape: f32[8,8], index: 0, kind: input, shape index: {}]
  %s1 = inlined_call_operand.hbm [shape: f32[8,128], index: 1, kind: input, shape index: {}]
  %s2 = inlined_call_operand.hbm [shape: bf16[8,8], index: 2, kind: input, shape index: {}]
  %s3 = inlined_call_operand.hbm [shape: f32[8,128], index: 3, kind: output, shape index: {}]
  %s4 = sld [smem:[#allocation0]]
  $region38: #{tpu_custom_call.1} parent=0
    _
  %s6 = ssub.s32 1, %s4
  %s7 = scalar_select 0, %s6, %s4
  $region1: #{tpu_custom_call.1} parent=0
    #allocation2 [shape = 'u8[4096]{0}', space=vmem, size = 0x1000, scoped, tag = 'input window, operand 0, single buffered']
    #allocation3 [shape = 's32[1]{0}', space=sflag, size = 0x4, scoped, tag = 'scoped memory for tpu_custom_call.1']
    #allocation4 [shape = 's32[1]{0}', space=sflag, size = 0x4, scoped, tag = 'scoped memory for tpu_custom_call.1']
    #allocation5 [shape = 'u8[4096]{0}', space=vmem, size = 0x1000, scoped, tag = 'input window, operand 1, single buffered']
    #allocation6 [shape = 's32[1]{0}', space=sflag, size = 0x4, scoped, tag = 'scoped memory for tpu_custom_call.1']
    #allocation7 [shape = 'u8[2048]{0}', space=vmem, size = 0x800, scoped, tag = 'input window, operand 2, single buffered']
    #allocation8 [shape = 'u8[4096]{0}', space=vmem, size = 0x1000, scoped, tag = 'output window, operand 0, single buffered']
    %8 = vsyncpa [#allocation3], 0
    %9 = vsyncpa [#allocation6], 0
    %10 = vsyncpa [#allocation4], 0
    // Predicated region
    $region2: #{tpu_custom_call.1} parent=1 // pred_check
      _
    $region3: #{tpu_custom_call.1} parent=1 // pred_check_branch
      %12 = sbr.rel (0) target = $region5
    $region4: #{tpu_custom_call.1} parent=1 // pred_region
      %14 = vsyncadd [#allocation3], 0
      %s16 = sshll.u32 %s0, 4
      %s17 = int_to_ptr.hbm [resolvable:$true] %s16
      %s18 = sshll.u32 [#allocation2], 4
      %s19 = int_to_ptr.vmem [resolvable:$true] %s18
      %21 = dma.hbm_to_vmem [thread:$0]  %s17, 128, %s19, [#allocation3]
    $region5: #{tpu_custom_call.1} parent=1 // pred_fallthru
      _
    // Predicated region
    $region6: #{tpu_custom_call.1} parent=1 // pred_check
      _
    $region7: #{tpu_custom_call.1} parent=1 // pred_check_branch
      %23 = sbr.rel (0) target = $region9
    $region8: #{tpu_custom_call.1} parent=1 // pred_region
      %25 = vsyncadd [#allocation6], 0
      %s27 = sshll.u32 %s1, 4
      %s28 = int_to_ptr.hbm [resolvable:$true] %s27
      %s29 = sshll.u32 [#allocation5], 4
      %s30 = int_to_ptr.vmem [resolvable:$true] %s29
      %32 = dma.hbm_to_vmem [thread:$0]  %s28, 128, %s30, [#allocation6]
    $region9: #{tpu_custom_call.1} parent=1 // pred_fallthru
      _
    // Predicated region
    $region10: #{tpu_custom_call.1} parent=1 // pred_check
      _
    $region11: #{tpu_custom_call.1} parent=1 // pred_check_branch
      %34 = sbr.rel (0) target = $region13
    $region12: #{tpu_custom_call.1} parent=1 // pred_region
      %36 = vsyncadd [#allocation6], 0
      %s38 = sshll.u32 %s2, 4
      %s39 = int_to_ptr.hbm [resolvable:$true] %s38
      %s40 = sshll.u32 [#allocation7], 4
      %s41 = int_to_ptr.vmem [resolvable:$true] %s40
      %43 = dma.hbm_to_vmem [thread:$0]  %s39, 64, %s41, [#allocation6]
    $region13: #{tpu_custom_call.1} parent=1 // pred_fallthru
      _
    // Predicated region
    $region14: #{tpu_custom_call.1} parent=1 // pred_check
      _
    $region15: #{tpu_custom_call.1} parent=1 // pred_check_branch
      %45 = sbr.rel (0) target = $region17
    $region16: #{tpu_custom_call.1} parent=1 // pred_region
      %47 = dma.done [#allocation3], 128
    $region17: #{tpu_custom_call.1} parent=1 // pred_fallthru
      _
    // Predicated region
    $region18: #{tpu_custom_call.1} parent=1 // pred_check
      _
    $region19: #{tpu_custom_call.1} parent=1 // pred_check_branch
      %49 = sbr.rel (0) target = $region21
    $region20: #{tpu_custom_call.1} parent=1 // pred_region
      %51 = dma.done [#allocation6], 128
    $region21: #{tpu_custom_call.1} parent=1 // pred_fallthru
      _
    // Predicated region
    $region22: #{tpu_custom_call.1} parent=1 // pred_check
      _
    $region23: #{tpu_custom_call.1} parent=1 // pred_check_branch
      %53 = sbr.rel (0) target = $region25
    $region24: #{tpu_custom_call.1} parent=1 // pred_region
      %55 = dma.done [#allocation6], 64
    $region25: #{tpu_custom_call.1} parent=1 // pred_fallthru
      _
    %p57 = scmp.eq.s32.totalorder 0, 0
    // Predicated region
    $region26: #{tpu_custom_call.1} parent=1 // pred_check
      %p58 = pneg %p57
    $region27: #{tpu_custom_call.1} parent=1 // pred_check_branch
      %60 = sbr.rel (%p58) target = $region29
    $region28: #{tpu_custom_call.1} parent=1 // pred_region
      %61 = vst [vmem:[#allocation8] sm:$0xff] 0.0
    $region29: #{tpu_custom_call.1} parent=1 // pred_fallthru
      _
    %v62 = vld [vmem:[#allocation2] sm:$0xff]
    %v63 = vld [vmem:[#allocation5] sm:$0xff]
    %vm64 = vcmask 64512
    %v66 = vsel %vm64, %v62, 0
    %68 = vmatpush.msra.mxu0 0.0
    %69 = vmatpush.msra.mxu0 0.0
    %70 = vmatpush.msra.mxu0 0.0
    %71 = vmatpush.msra.mxu0 0.0
    %72 = vmatpush.msra.mxu0 0.0
    %73 = vmatpush.msra.mxu0 0.0
    %74 = vmatpush.msra.mxu0 0.0
    %75 = vmatpush.msra.mxu0 0.0
    %76 = vmatpush.msra.mxu0 0.0
    %77 = vmatpush.msra.mxu0 0.0
    %78 = vmatpush.msra.mxu0 0.0
    %79 = vmatpush.msra.mxu0 0.0
    %80 = vmatpush.msra.mxu0 0.0
    %81 = vmatpush.msra.mxu0 0.0
    %82 = vmatpush.msra.mxu0 0.0
    %83 = vmatpush.msra.mxu0 %v63
    %84 = vmatmul.f32.gmra.mxu0 %v66
    %v85 = vpop.f32.mrf.mxu0
    %v86 = vadd.f32 0.0, %v85
    %87 = vdwg.mxu0
    %v88 = vpow.pop %v86
    %v89 = vpack.c.bf16 %v88, %v88
    %v90 = vld [vmem:[#allocation8] sm:$0xff]
    %v91 = vld [vmem:[#allocation7] sm:$0xf]
    %v93 = vsel %vm64, %v91, 0
    %vm95 = vcmask 1043456
    %v97 = vsel %vm95, %v89, 0
    %99 = vmatpush.bf16.msra.mxu0 0
    %100 = vmatpush.bf16.msra.mxu0 0
    %101 = vmatpush.bf16.msra.mxu0 0
    %102 = vmatpush.bf16.msra.mxu0 0
    %103 = vmatpush.bf16.msra.mxu0 0
    %104 = vmatpush.bf16.msra.mxu0 0
    %105 = vmatpush.bf16.msra.mxu0 0
    %106 = vmatpush.bf16.msra.mxu0 %v97
    %107 = vmatmul.bf16.gmra.mxu0 %v93
    %v108 = vpop.f32.mrf.mxu0
    %v109 = vadd.f32 0.0, %v108
    %v110 = vpop.f32.mrf.mxu0
    %111 = vdwg.mxu0
    %v112 = vadd.f32 %v90, %v109
    %113 = vst [vmem:[#allocation8] sm:$0xff] %v112
    // Predicated region
    $region30: #{tpu_custom_call.1} parent=1 // pred_check
      _
    $region31: #{tpu_custom_call.1} parent=1 // pred_check_branch
      %115 = sbr.rel (0) target = $region33
    $region32: #{tpu_custom_call.1} parent=1 // pred_region
      %117 = vsyncadd [#allocation4], 0
      %s119 = sshll.u32 [#allocation8], 4
      %s120 = int_to_ptr.vmem [resolvable:$true] %s119
      %s121 = sshll.u32 %s3, 4
      %s122 = int_to_ptr.hbm [resolvable:$true] %s121
      %124 = dma.vmem_to_hbm [thread:$0]  %s120, 128, %s122, [#allocation4]
    $region33: #{tpu_custom_call.1} parent=1 // pred_fallthru
      _
    // Predicated region
    $region34: #{tpu_custom_call.1} parent=1 // pred_check
      _
    $region35: #{tpu_custom_call.1} parent=1 // pred_check_branch
      %126 = sbr.rel (0) target = $region37
    $region36: #{tpu_custom_call.1} parent=1 // pred_region
      %128 = dma.done [#allocation4], 128
    $region37: #{tpu_custom_call.1} parent=1 // pred_fallthru
      _
    %129 = vsyncpa [#allocation3], 1
    %130 = vsyncpa [#allocation6], 1
    %131 = vsyncpa [#allocation4], 1

</llo_original>
